<compile_context>
chip_gen: v7x
topology: tpu7x:2x2x1
jax: 0.10.0
libtpu: 0.0.40
codegen_flags: <defaults>
</compile_context>

<pallas_src>
import jax
import jax.numpy as jnp
from jax import lax
from jax.experimental import pallas as pl
from jax.experimental.pallas import tpu as pltpu


def _round_up(x, m):
    return ((x + m - 1) // m) * m


def _linear_kernel_f32(x_ref, w_ref, o_ref):
    """f32 output: accumulate directly into the resident output block (no scratch)."""
    @pl.when(pl.program_id(2) == 0)
    def _():
        o_ref[...] = jnp.zeros_like(o_ref)

    # x_ref: (tm, tk), w_ref: (tn, tk) -> contract lane dim of both -> (tm, tn).
    o_ref[...] += lax.dot_general(
        x_ref[...], w_ref[...],
        dimension_numbers=(((1,), (1,)), ((), ())),
        preferred_element_type=jnp.float32,
    )


def _linear_kernel_acc(x_ref, w_ref, o_ref, acc_ref):
    """Low-precision output: f32 accumulation in VMEM scratch, single cast at the end."""
    @pl.when(pl.program_id(2) == 0)
    def _():
        acc_ref[...] = jnp.zeros_like(acc_ref)

    acc_ref[...] += lax.dot_general(
        x_ref[...], w_ref[...],
        dimension_numbers=(((1,), (1,)), ((), ())),
        preferred_element_type=jnp.float32,
    )

    @pl.when(pl.program_id(2) == pl.num_programs(2) - 1)
    def _():
        o_ref[...] = acc_ref[...].astype(o_ref.dtype)


@jax.jit
def fast_linear(x, weight):
    """FastLinear.forward with bias=None:  x[M,K] @ weight[N,K].T -> [M,N]."""
    M, K = x.shape
    N, K2 = weight.shape
    assert K == K2, "in_features mismatch"

    itemsize = x.dtype.itemsize
    # Sublane packing: f32 -> 8, bf16 -> 16, int8/fp8 -> 32.
    sub = {4: 8, 2: 16, 1: 32}.get(itemsize, 8)

    # Decode-shaped LM heads are HBM-bound on weight streaming: take the whole
    # (small) M dimension, large lane-dense N tiles, large K tiles.
    tm = min(_round_up(M, sub), 256)
    tn = min(_round_up(N, 128), 1024)
    tk = min(_round_up(K, 128), 1024)

    M_pad = _round_up(M, tm)
    N_pad = _round_up(N, tn)
    K_pad = _round_up(K, tk)

    x_p = x if (M_pad == M and K_pad == K) else jnp.pad(
        x, ((0, M_pad - M), (0, K_pad - K)))
    w_p = weight if (N_pad == N and K_pad == K) else jnp.pad(
        weight, ((0, N_pad - N), (0, K_pad - K)))

    grid = (M_pad // tm, N_pad // tn, K_pad // tk)

    out_dtype = x.dtype
    if out_dtype == jnp.float32:
        kernel = _linear_kernel_f32
        scratch = []
    else:
        kernel = _linear_kernel_acc
        scratch = [pltpu.VMEM((tm, tn), jnp.float32)]

    # Double-buffered working set; clamp the scoped VMEM limit under v7x's 64 MiB.
    budget = 2 * (tm * tk + tn * tk + tm * tn) * itemsize + tm * tn * 4
    vmem_limit = int(min(56 * 1024 * 1024, max(32 * 1024 * 1024, 2 * budget)))

    out = pl.pallas_call(
        kernel,
        out_shape=jax.ShapeDtypeStruct((M_pad, N_pad), out_dtype),
        grid_spec=pltpu.PrefetchScalarGridSpec(
            num_scalar_prefetch=0,
            grid=grid,
            in_specs=[
                pl.BlockSpec((tm, tk), lambda i, j, k: (i, k)),  # x tile
                pl.BlockSpec((tn, tk), lambda i, j, k: (j, k)),  # weight tile [N,K]
            ],
            out_specs=pl.BlockSpec((tm, tn), lambda i, j, k: (i, j)),
            scratch_shapes=scratch,
        ),
        compiler_params=pltpu.CompilerParams(
            dimension_semantics=("parallel", "parallel", "arbitrary"),
            vmem_limit_bytes=vmem_limit,
        ),
    )(x_p, w_p)

    if M_pad != M or N_pad != N:
        out = out[:M, :N]
    return out


def tensor_parallel_head_forward(x, weight, *, world_size=1, should_gather=False):
    """TensorParallelHead.forward (single-device simulation of the TP group).

    weight: full [N, K] head weight.  When should_gather=True, the shards a real
    TP group would hold are dim-0 slices of `weight`; their outputs concatenated
    along the last dim equal the full x @ weight.T, so a single fused pallas_call
    over the whole weight produces the identical result with no per-shard
    dispatch or concat copy.
    """
    del world_size  # shard count does not change the single-device result
    if not should_gather:
        return fast_linear(x, weight)
    # TODO(synk): on a real multi-device TP mesh this must become a per-rank
    # sharded matmul with the all-gather fused in-kernel via
    # pltpu.make_async_remote_copy (ring) interleaved with the matmul steps.
    return fast_linear(x, weight)


if __name__ == "__main__":
    key = jax.random.PRNGKey(0)
    kx, kw, kx2, kw2 = jax.random.split(key, 4)

    M, K, N = 8, 256, 512          # tokens, hidden, vocab (head out_features)
    WORLD_SIZE = 2

    x = jax.random.normal(kx, (M, K), dtype=jnp.float32)
    weight = jax.random.normal(kw, (N, K), dtype=jnp.float32) * 0.02

    # Path 1: should_gather=False (single-rank head)
    out_single = jax.block_until_ready(
        tensor_parallel_head_forward(x, weight, world_size=1, should_gather=False))

    # Path 2: should_gather=True (simulated 2-way tensor-parallel head)
    out_tp = jax.block_until_ready(
        tensor_parallel_head_forward(x, weight, world_size=WORLD_SIZE,
                                     should_gather=True))

    ref = x @ weight.T
    assert out_single.shape == (M, N)
    assert out_tp.shape == (M, N)
    assert jnp.allclose(out_single, ref, atol=1e-4, rtol=1e-4)
    assert jnp.allclose(out_tp, ref, atol=1e-4, rtol=1e-4)

    # Uneven (non-tile-multiple) shapes exercise the pad-and-slice path.
    M2, K2, N2 = 3, 200, 300
    x2 = jax.random.normal(kx2, (M2, K2), dtype=jnp.float32)
    w2 = jax.random.normal(kw2, (N2, K2), dtype=jnp.float32) * 0.02
    out2 = jax.block_until_ready(
        tensor_parallel_head_forward(x2, w2, should_gather=False))
    ref2 = x2 @ w2.T
    assert out2.shape == (M2, N2)
    assert jnp.allclose(out2, ref2, atol=1e-4, rtol=1e-4)

    # bf16 weights/activations exercise the f32-scratch accumulator variant
    # (the bandwidth-saving dtype recommended for v6e; also valid on v7x).
    xb = x.astype(jnp.bfloat16)
    wb = weight.astype(jnp.bfloat16)
    outb = jax.block_until_ready(
        tensor_parallel_head_forward(xb, wb, world_size=WORLD_SIZE,
                                     should_gather=True))
    refb = xb.astype(jnp.float32) @ wb.astype(jnp.float32).T
    assert outb.dtype == jnp.bfloat16
    assert jnp.allclose(outb.astype(jnp.float32), refb, atol=5e-2, rtol=5e-2)

    print("KERNEL_OK")
</pallas_src>

<mosaic_0001>
module attributes {stable_mosaic.version = 11 : i64} {
  func.func @_linear_kernel_f32(%arg0: i32, %arg1: i32, %arg2: i32, %arg3: memref<8x256xf32, #tpu.memory_space<vmem>>, %arg4: memref<512x256xf32, #tpu.memory_space<vmem>>, %arg5: memref<8x512xf32, #tpu.memory_space<vmem>>) attributes {dimension_semantics = [#tpu.dimension_semantics<parallel>, #tpu.dimension_semantics<parallel>, #tpu.dimension_semantics<arbitrary>], iteration_bounds = array<i64: 1, 1, 1>, scalar_prefetch = 0 : i64, scratch_operands = 0 : i64, tpu.core_type = #tpu.core_type<tc>, window_params = [{transform_indices = @transform_0, window_bounds = array<i64: 8, 256>}, {transform_indices = @transform_1, window_bounds = array<i64: 512, 256>}, {transform_indices = @transform_2, window_bounds = array<i64: 8, 512>}]} {
    %c0_i32 = arith.constant 0 : i32
    %0 = arith.cmpi eq, %arg2, %c0_i32 : i32
    %1 = arith.extui %0 : i1 to i32
    %c0_i32_0 = arith.constant 0 : i32
    %2 = arith.cmpi ne, %1, %c0_i32_0 : i32
    scf.if %2 {
      %cst_8 = arith.constant 0.000000e+00 : f32
      %9 = vector.broadcast %cst_8 : f32 to vector<8x512xf32>
      %c0_9 = arith.constant 0 : index
      %c0_10 = arith.constant 0 : index
      %10 = vector.load %arg5[%c0_9, %c0_10] : memref<8x512xf32, #tpu.memory_space<vmem>>, vector<8x512xf32>
      tpu.vector_store %arg5[%c0_9, %c0_10], %9 {strides = array<i32>} : memref<8x512xf32, #tpu.memory_space<vmem>>, vector<8x512xf32>,
    } else {
    }
    %c0 = arith.constant 0 : index
    %c0_1 = arith.constant 0 : index
    %3 = vector.load %arg5[%c0, %c0_1] : memref<8x512xf32, #tpu.memory_space<vmem>>, vector<8x512xf32>
    %c0_2 = arith.constant 0 : index
    %c0_3 = arith.constant 0 : index
    %4 = vector.load %arg3[%c0_2, %c0_3] : memref<8x256xf32, #tpu.memory_space<vmem>>, vector<8x256xf32>
    %c0_4 = arith.constant 0 : index
    %c0_5 = arith.constant 0 : index
    %5 = vector.load %arg4[%c0_4, %c0_5] : memref<512x256xf32, #tpu.memory_space<vmem>>, vector<512x256xf32>
    %cst = arith.constant dense<0.000000e+00> : vector<8x512xf32>
    %6 = tpu.matmul %4, %5, %cst {dimension_numbers = #tpu.dot_dimension_numbers<[1], [1], [0], [0], [0, 0, 1, 0], [], []>} : vector<8x256xf32>, vector<512x256xf32>, vector<8x512xf32> -> vector<8x512xf32>
    %7 = arith.addf %3, %6 : vector<8x512xf32>
    %c0_6 = arith.constant 0 : index
    %c0_7 = arith.constant 0 : index
    %8 = vector.load %arg5[%c0_6, %c0_7] : memref<8x512xf32, #tpu.memory_space<vmem>>, vector<8x512xf32>
    tpu.vector_store %arg5[%c0_6, %c0_7], %7 {strides = array<i32>} : memref<8x512xf32, #tpu.memory_space<vmem>>, vector<8x512xf32>,
    return
  }
  func.func @transform_0(%arg0: i32, %arg1: i32, %arg2: i32) -> (i32, i32) {
    %c0_i32 = arith.constant 0 : i32
    return %arg0, %arg2 : i32, i32
  }
  func.func @transform_1(%arg0: i32, %arg1: i32, %arg2: i32) -> (i32, i32) {
    %c0_i32 = arith.constant 0 : i32
    return %arg1, %arg2 : i32, i32
  }
  func.func @transform_2(%arg0: i32, %arg1: i32, %arg2: i32) -> (i32, i32) {
    %c0_i32 = arith.constant 0 : i32
    return %arg0, %arg1 : i32, i32
  }
}

</mosaic_0001>

<llo_original>
// kernel: fast_linear.1
$region0: #{fast_linear.1}
  #allocation0 [shape = 'u32[]', space=smem, size = 0x4, offset = 0x4, fixed_abs, tag = 'smem constant byte address 0x4 - core index']
  #allocation1 [shape = 'u32[144,128]{1,0:T(1,128)}', space=vmem, size = 0x12000, scoped, tag = 'internal scratch']
  %s0 = inlined_call_operand.hbm [shape: f32[8,256], index: 0, kind: input, shape index: {}]
  %s1 = inlined_call_operand.hbm [shape: f32[512,256], index: 1, kind: input, shape index: {}]
  %s2 = inlined_call_operand.hbm [shape: f32[8,512], index: 2, kind: output, shape index: {}]
  %s3 = sld [smem:[#allocation0]]
  $region30: #{fast_linear.1} parent=0
    _
  %s5 = ssub.s32 1, %s3
  %s6 = scalar_select 0, %s5, %s3
  $region1: #{fast_linear.1} parent=0
    #allocation2 [shape = 'u8[8192]{0}', space=vmem, size = 0x2000, scoped, tag = 'input window, operand 0, single buffered']
    #allocation3 [shape = 's32[1]{0}', space=sflag, size = 0x4, scoped, tag = 'scoped memory for fast_linear.1']
    #allocation4 [shape = 's32[1]{0}', space=sflag, size = 0x4, scoped, tag = 'scoped memory for fast_linear.1']
    #allocation5 [shape = 'u8[524288]{0}', space=vmem, size = 0x80000, scoped, tag = 'input window, operand 1, single buffered']
    #allocation6 [shape = 's32[1]{0}', space=sflag, size = 0x4, scoped, tag = 'scoped memory for fast_linear.1']
    #allocation7 [shape = 'u8[16384]{0}', space=vmem, size = 0x4000, scoped, tag = 'output window, operand 0, single buffered']
    %7 = vsyncpa [#allocation3], 0
    %8 = vsyncpa [#allocation6], 0
    %9 = vsyncpa [#allocation4], 0
    // Predicated region
    $region2: #{fast_linear.1} parent=1 // pred_check
      _
    $region3: #{fast_linear.1} parent=1 // pred_check_branch
      %11 = sbr.rel (0) target = $region5
    $region4: #{fast_linear.1} parent=1 // pred_region
      %s13 = ssub.s32 256, 256
      %14 = vsyncadd [#allocation3], %s13
      %s16 = sshll.u32 [#allocation2], 4
      %s17 = int_to_ptr.vmem [resolvable:$true] %s16
      %19 = dma.hbm_to_vmem [thread:$0]  %s0, 256, %s17, [#allocation3]
    $region5: #{fast_linear.1} parent=1 // pred_fallthru
      _
    // Predicated region
    $region6: #{fast_linear.1} parent=1 // pred_check
      _
    $region7: #{fast_linear.1} parent=1 // pred_check_branch
      %21 = sbr.rel (0) target = $region9
    $region8: #{fast_linear.1} parent=1 // pred_region
      %s23 = ssub.s32 16384, 16384
      %24 = vsyncadd [#allocation6], %s23
      %s25 = sshll.u32 [#allocation5], 4
      %s26 = int_to_ptr.vmem [resolvable:$true] %s25
      %31 = dma.hbm_to_vmem [thread:$0]  %s1, 16384, %s26, [#allocation6], 256, 256, 16
    $region9: #{fast_linear.1} parent=1 // pred_fallthru
      _
    // Predicated region
    $region10: #{fast_linear.1} parent=1 // pred_check
      _
    $region11: #{fast_linear.1} parent=1 // pred_check_branch
      %33 = sbr.rel (0) target = $region13
    $region12: #{fast_linear.1} parent=1 // pred_region
      %34 = dma.done [#allocation3], 256
    $region13: #{fast_linear.1} parent=1 // pred_fallthru
      _
    // Predicated region
    $region14: #{fast_linear.1} parent=1 // pred_check
      _
    $region15: #{fast_linear.1} parent=1 // pred_check_branch
      %36 = sbr.rel (0) target = $region17
    $region16: #{fast_linear.1} parent=1 // pred_region
      %37 = dma.done [#allocation6], 16384
    $region17: #{fast_linear.1} parent=1 // pred_fallthru
      _
    %p38 = scmp.eq.s32.totalorder 0, 0
    // Predicated region
    $region18: #{fast_linear.1} parent=1 // pred_check
      %p39 = pneg %p38
    $region19: #{fast_linear.1} parent=1 // pred_check_branch
      %41 = sbr.rel (%p39) target = $region21
    $region20: #{fast_linear.1} parent=1 // pred_region
      %42 = vst [vmem:[#allocation7] sm:$0xff] 0.0
      %43 = vst [vmem:[#allocation7 + $0x8] sm:$0xff] 0.0
      %44 = vst [vmem:[#allocation7 + $0x10] sm:$0xff] 0.0
      %45 = vst [vmem:[#allocation7 + $0x18] sm:$0xff] 0.0
    $region21: #{fast_linear.1} parent=1 // pred_fallthru
      _
    %v46 = vld [vmem:[#allocation7] sm:$0xff]
    %v47 = vld [vmem:[#allocation7 + $0x8] sm:$0xff]
    %v48 = vld [vmem:[#allocation7 + $0x10] sm:$0xff]
    %v49 = vld [vmem:[#allocation7 + $0x18] sm:$0xff]
    %v50 = vld [vmem:[#allocation2] sm:$0xff]
    %v51 = vld [vmem:[#allocation2 + $0x8] sm:$0xff]
    %v52 = vld [vmem:[#allocation5] sm:$0xff]
    %v53 = vld [vmem:[#allocation5 + $0x8] sm:$0xff]
    %v54 = vld [vmem:[#allocation5 + $0x10] sm:$0xff]
    %v55 = vld [vmem:[#allocation5 + $0x18] sm:$0xff]
    %v56 = vld [vmem:[#allocation5 + $0x20] sm:$0xff]
    %v57 = vld [vmem:[#allocation5 + $0x28] sm:$0xff]
    %v58 = vld [vmem:[#allocation5 + $0x30] sm:$0xff]
    %v59 = vld [vmem:[#allocation5 + $0x38] sm:$0xff]
    %v60 = vld [vmem:[#allocation5 + $0x40] sm:$0xff]
    %v61 = vld [vmem:[#allocation5 + $0x48] sm:$0xff]
    %v62 = vld [vmem:[#allocation5 + $0x50] sm:$0xff]
    %v63 = vld [vmem:[#allocation5 + $0x58] sm:$0xff]
    %v64 = vld [vmem:[#allocation5 + $0x60] sm:$0xff]
    %v65 = vld [vmem:[#allocation5 + $0x68] sm:$0xff]
    %v66 = vld [vmem:[#allocation5 + $0x70] sm:$0xff]
    %v67 = vld [vmem:[#allocation5 + $0x78] sm:$0xff]
    %v68 = vld [vmem:[#allocation5 + $0x80] sm:$0xff]
    %v69 = vld [vmem:[#allocation5 + $0x88] sm:$0xff]
    %v70 = vld [vmem:[#allocation5 + $0x90] sm:$0xff]
    %v71 = vld [vmem:[#allocation5 + $0x98] sm:$0xff]
    %v72 = vld [vmem:[#allocation5 + $0xa0] sm:$0xff]
    %v73 = vld [vmem:[#allocation5 + $0xa8] sm:$0xff]
    %v74 = vld [vmem:[#allocation5 + $0xb0] sm:$0xff]
    %v75 = vld [vmem:[#allocation5 + $0xb8] sm:$0xff]
    %v76 = vld [vmem:[#allocation5 + $0xc0] sm:$0xff]
    %v77 = vld [vmem:[#allocation5 + $0xc8] sm:$0xff]
    %v78 = vld [vmem:[#allocation5 + $0xd0] sm:$0xff]
    %v79 = vld [vmem:[#allocation5 + $0xd8] sm:$0xff]
    %v80 = vld [vmem:[#allocation5 + $0xe0] sm:$0xff]
    %v81 = vld [vmem:[#allocation5 + $0xe8] sm:$0xff]
    %v82 = vld [vmem:[#allocation5 + $0xf0] sm:$0xff]
    %v83 = vld [vmem:[#allocation5 + $0xf8] sm:$0xff]
    %v84 = vld [vmem:[#allocation5 + $0x100] sm:$0xff]
    %v85 = vld [vmem:[#allocation5 + $0x108] sm:$0xff]
    %v86 = vld [vmem:[#allocation5 + $0x110] sm:$0xff]
    %v87 = vld [vmem:[#allocation5 + $0x118] sm:$0xff]
    %v88 = vld [vmem:[#allocation5 + $0x120] sm:$0xff]
    %v89 = vld [vmem:[#allocation5 + $0x128] sm:$0xff]
    %v90 = vld [vmem:[#allocation5 + $0x130] sm:$0xff]
    %v91 = vld [vmem:[#allocation5 + $0x138] sm:$0xff]
    %v92 = vld [vmem:[#allocation5 + $0x140] sm:$0xff]
    %v93 = vld [vmem:[#allocation5 + $0x148] sm:$0xff]
    %v94 = vld [vmem:[#allocation5 + $0x150] sm:$0xff]
    %v95 = vld [vmem:[#allocation5 + $0x158] sm:$0xff]
    %v96 = vld [vmem:[#allocation5 + $0x160] sm:$0xff]
    %v97 = vld [vmem:[#allocation5 + $0x168] sm:$0xff]
    %v98 = vld [vmem:[#allocation5 + $0x170] sm:$0xff]
    %v99 = vld [vmem:[#allocation5 + $0x178] sm:$0xff]
    %v100 = vld [vmem:[#allocation5 + $0x180] sm:$0xff]
    %v101 = vld [vmem:[#allocation5 + $0x188] sm:$0xff]
    %v102 = vld [vmem:[#allocation5 + $0x190] sm:$0xff]
    %v103 = vld [vmem:[#allocation5 + $0x198] sm:$0xff]
    %v104 = vld [vmem:[#allocation5 + $0x1a0] sm:$0xff]
    %v105 = vld [vmem:[#allocation5 + $0x1a8] sm:$0xff]
    %v106 = vld [vmem:[#allocation5 + $0x1b0] sm:$0xff]
    %v107 = vld [vmem:[#allocation5 + $0x1b8] sm:$0xff]
    %v108 = vld [vmem:[#allocation5 + $0x1c0] sm:$0xff]
    %v109 = vld [vmem:[#allocation5 + $0x1c8] sm:$0xff]
    %v110 = vld [vmem:[#allocation5 + $0x1d0] sm:$0xff]
    %v111 = vld [vmem:[#allocation5 + $0x1d8] sm:$0xff]
    %v112 = vld [vmem:[#allocation5 + $0x1e0] sm:$0xff]
    %v113 = vld [vmem:[#allocation5 + $0x1e8] sm:$0xff]
    %v114 = vld [vmem:[#allocation5 + $0x1f0] sm:$0xff]
    %v115 = vld [vmem:[#allocation5 + $0x1f8] sm:$0xff]
    %v116 = vld [vmem:[#allocation5 + $0x200] sm:$0xff]
    %v117 = vld [vmem:[#allocation5 + $0x208] sm:$0xff]
    %v118 = vld [vmem:[#allocation5 + $0x210] sm:$0xff]
    %v119 = vld [vmem:[#allocation5 + $0x218] sm:$0xff]
    %v120 = vld [vmem:[#allocation5 + $0x220] sm:$0xff]
    %v121 = vld [vmem:[#allocation5 + $0x228] sm:$0xff]
    %v122 = vld [vmem:[#allocation5 + $0x230] sm:$0xff]
    %v123 = vld [vmem:[#allocation5 + $0x238] sm:$0xff]
    %v124 = vld [vmem:[#allocation5 + $0x240] sm:$0xff]
    %v125 = vld [vmem:[#allocation5 + $0x248] sm:$0xff]
    %v126 = vld [vmem:[#allocation5 + $0x250] sm:$0xff]
    %v127 = vld [vmem:[#allocation5 + $0x258] sm:$0xff]
    %v128 = vld [vmem:[#allocation5 + $0x260] sm:$0xff]
    %v129 = vld [vmem:[#allocation5 + $0x268] sm:$0xff]
    %v130 = vld [vmem:[#allocation5 + $0x270] sm:$0xff]
    %v131 = vld [vmem:[#allocation5 + $0x278] sm:$0xff]
    %v132 = vld [vmem:[#allocation5 + $0x280] sm:$0xff]
    %v133 = vld [vmem:[#allocation5 + $0x288] sm:$0xff]
    %v134 = vld [vmem:[#allocation5 + $0x290] sm:$0xff]
    %v135 = vld [vmem:[#allocation5 + $0x298] sm:$0xff]
    %v136 = vld [vmem:[#allocation5 + $0x2a0] sm:$0xff]
    %v137 = vld [vmem:[#allocation5 + $0x2a8] sm:$0xff]
    %v138 = vld [vmem:[#allocation5 + $0x2b0] sm:$0xff]
    %v139 = vld [vmem:[#allocation5 + $0x2b8] sm:$0xff]
    %v140 = vld [vmem:[#allocation5 + $0x2c0] sm:$0xff]
    %v141 = vld [vmem:[#allocation5 + $0x2c8] sm:$0xff]
    %v142 = vld [vmem:[#allocation5 + $0x2d0] sm:$0xff]
    %v143 = vld [vmem:[#allocation5 + $0x2d8] sm:$0xff]
    %v144 = vld [vmem:[#allocation5 + $0x2e0] sm:$0xff]
    %v145 = vld [vmem:[#allocation5 + $0x2e8] sm:$0xff]
    %v146 = vld [vmem:[#allocation5 + $0x2f0] sm:$0xff]
    %v147 = vld [vmem:[#allocation5 + $0x2f8] sm:$0xff]
    %v148 = vld [vmem:[#allocation5 + $0x300] sm:$0xff]
    %v149 = vld [vmem:[#allocation5 + $0x308] sm:$0xff]
    %v150 = vld [vmem:[#allocation5 + $0x310] sm:$0xff]
    %v151 = vld [vmem:[#allocation5 + $0x318] sm:$0xff]
    %v152 = vld [vmem:[#allocation5 + $0x320] sm:$0xff]
    %v153 = vld [vmem:[#allocation5 + $0x328] sm:$0xff]
    %v154 = vld [vmem:[#allocation5 + $0x330] sm:$0xff]
    %v155 = vld [vmem:[#allocation5 + $0x338] sm:$0xff]
    %v156 = vld [vmem:[#allocation5 + $0x340] sm:$0xff]
    %v157 = vld [vmem:[#allocation5 + $0x348] sm:$0xff]
    %v158 = vld [vmem:[#allocation5 + $0x350] sm:$0xff]
    %v159 = vld [vmem:[#allocation5 + $0x358] sm:$0xff]
    %v160 = vld [vmem:[#allocation5 + $0x360] sm:$0xff]
    %v161 = vld [vmem:[#allocation5 + $0x368] sm:$0xff]
    %v162 = vld [vmem:[#allocation5 + $0x370] sm:$0xff]
    %v163 = vld [vmem:[#allocation5 + $0x378] sm:$0xff]
    %v164 = vld [vmem:[#allocation5 + $0x380] sm:$0xff]
    %v165 = vld [vmem:[#allocation5 + $0x388] sm:$0xff]
    %v166 = vld [vmem:[#allocation5 + $0x390] sm:$0xff]
    %v167 = vld [vmem:[#allocation5 + $0x398] sm:$0xff]
    %v168 = vld [vmem:[#allocation5 + $0x3a0] sm:$0xff]
    %v169 = vld [vmem:[#allocation5 + $0x3a8] sm:$0xff]
    %v170 = vld [vmem:[#allocation5 + $0x3b0] sm:$0xff]
    %v171 = vld [vmem:[#allocation5 + $0x3b8] sm:$0xff]
    %v172 = vld [vmem:[#allocation5 + $0x3c0] sm:$0xff]
    %v173 = vld [vmem:[#allocation5 + $0x3c8] sm:$0xff]
    %v174 = vld [vmem:[#allocation5 + $0x3d0] sm:$0xff]
    %v175 = vld [vmem:[#allocation5 + $0x3d8] sm:$0xff]
    %v176 = vld [vmem:[#allocation5 + $0x3e0] sm:$0xff]
    %v177 = vld [vmem:[#allocation5 + $0x3e8] sm:$0xff]
    %v178 = vld [vmem:[#allocation5 + $0x3f0] sm:$0xff]
    %v179 = vld [vmem:[#allocation5 + $0x3f8] sm:$0xff]
    %180 = vmatprep.subr.mxu0 %v53
    %181 = vmatpush1.xpose.msra.mxu0 %v52
    %182 = vmatprep.subr.mxu0 %v55
    %183 = vmatpush1.xpose.msra.mxu0 %v54
    %184 = vmatprep.subr.mxu0 %v57
    %185 = vmatpush1.xpose.msra.mxu0 %v56
    %186 = vmatprep.subr.mxu0 %v59
    %187 = vmatpush1.xpose.msra.mxu0 %v58
    %188 = vmatprep.subr.mxu0 %v61
    %189 = vmatpush1.xpose.msra.mxu0 %v60
    %190 = vmatprep.subr.mxu0 %v63
    %191 = vmatpush1.xpose.msra.mxu0 %v62
    %192 = vmatprep.subr.mxu0 %v65
    %193 = vmatpush1.xpose.msra.mxu0 %v64
    %194 = vmatprep.subr.mxu0 %v67
    %195 = vmatpush1.xpose.msra.mxu0 %v66
    %196 = vmatprep.subr.mxu0 %v69
    %197 = vmatpush1.xpose.msra.mxu0 %v68
    %198 = vmatprep.subr.mxu0 %v71
    %199 = vmatpush1.xpose.msra.mxu0 %v70
    %200 = vmatprep.subr.mxu0 %v73
    %201 = vmatpush1.xpose.msra.mxu0 %v72
    %202 = vmatprep.subr.mxu0 %v75
    %203 = vmatpush1.xpose.msra.mxu0 %v74
    %204 = vmatprep.subr.mxu0 %v77
    %205 = vmatpush1.xpose.msra.mxu0 %v76
    %206 = vmatprep.subr.mxu0 %v79
    %207 = vmatpush1.xpose.msra.mxu0 %v78
    %208 = vmatprep.subr.mxu0 %v81
    %209 = vmatpush1.xpose.msra.mxu0 %v80
    %210 = vmatprep.subr.mxu0 %v83
    %211 = vmatpush1.xpose.msra.mxu0 %v82
    %212 = vmatprep.subr.mxu0 %v85
    %213 = vmatpush1.xpose.msra.mxu0 %v84
    %214 = vmatprep.subr.mxu0 %v87
    %215 = vmatpush1.xpose.msra.mxu0 %v86
    %216 = vmatprep.subr.mxu0 %v89
    %217 = vmatpush1.xpose.msra.mxu0 %v88
    %218 = vmatprep.subr.mxu0 %v91
    %219 = vmatpush1.xpose.msra.mxu0 %v90
    %220 = vmatprep.subr.mxu0 %v93
    %221 = vmatpush1.xpose.msra.mxu0 %v92
    %222 = vmatprep.subr.mxu0 %v95
    %223 = vmatpush1.xpose.msra.mxu0 %v94
    %224 = vmatprep.subr.mxu0 %v97
    %225 = vmatpush1.xpose.msra.mxu0 %v96
    %226 = vmatprep.subr.mxu0 %v99
    %227 = vmatpush1.xpose.msra.mxu0 %v98
    %228 = vmatprep.subr.mxu0 %v101
    %229 = vmatpush1.xpose.msra.mxu0 %v100
    %230 = vmatprep.subr.mxu0 %v103
    %231 = vmatpush1.xpose.msra.mxu0 %v102
    %232 = vmatprep.subr.mxu0 %v105
    %233 = vmatpush1.xpose.msra.mxu0 %v104
    %234 = vmatprep.subr.mxu0 %v107
    %235 = vmatpush1.xpose.msra.mxu0 %v106
    %236 = vmatprep.subr.mxu0 %v109
    %237 = vmatpush1.xpose.msra.mxu0 %v108
    %238 = vmatprep.subr.mxu0 %v111
    %239 = vmatpush1.xpose.msra.mxu0 %v110
    %240 = vmatprep.subr.mxu0 %v113
    %241 = vmatpush1.xpose.msra.mxu0 %v112
    %242 = vmatprep.subr.mxu0 %v115
    %243 = vmatpush1.xpose.msra.mxu0 %v114
    %244 = vmatprep.mubr.f32.mxu0 %v51
    %245 = vmatmul.mubr.f32.gmra.mrb[0].mxu0 %v50
    %v246 = vpop.f32.mrb[0].mxu0
    %v247 = vadd.f32 0.0, %v246
    %v248 = vpop.f32.mrb[0].mxu0
    %v249 = vadd.f32 0.0, %v248
    %250 = vdwg.mxu0
    %251 = vmatprep.subr.mxu0 %v117
    %252 = vmatpush1.xpose.msra.mxu0 %v116
    %253 = vmatprep.subr.mxu0 %v119
    %254 = vmatpush1.xpose.msra.mxu0 %v118
    %255 = vmatprep.subr.mxu0 %v121
    %256 = vmatpush1.xpose.msra.mxu0 %v120
    %257 = vmatprep.subr.mxu0 %v123
    %258 = vmatpush1.xpose.msra.mxu0 %v122
    %259 = vmatprep.subr.mxu0 %v125
    %260 = vmatpush1.xpose.msra.mxu0 %v124
    %261 = vmatprep.subr.mxu0 %v127
    %262 = vmatpush1.xpose.msra.mxu0 %v126
    %263 = vmatprep.subr.mxu0 %v129
    %264 = vmatpush1.xpose.msra.mxu0 %v128
    %265 = vmatprep.subr.mxu0 %v131
    %266 = vmatpush1.xpose.msra.mxu0 %v130
    %267 = vmatprep.subr.mxu0 %v133
    %268 = vmatpush1.xpose.msra.mxu0 %v132
    %269 = vmatprep.subr.mxu0 %v135
    %270 = vmatpush1.xpose.msra.mxu0 %v134
    %271 = vmatprep.subr.mxu0 %v137
    %272 = vmatpush1.xpose.msra.mxu0 %v136
    %273 = vmatprep.subr.mxu0 %v139
    %274 = vmatpush1.xpose.msra.mxu0 %v138
    %275 = vmatprep.subr.mxu0 %v141
    %276 = vmatpush1.xpose.msra.mxu0 %v140
    %277 = vmatprep.subr.mxu0 %v143
    %278 = vmatpush1.xpose.msra.mxu0 %v142
    %279 = vmatprep.subr.mxu0 %v145
    %280 = vmatpush1.xpose.msra.mxu0 %v144
    %281 = vmatprep.subr.mxu0 %v147
    %282 = vmatpush1.xpose.msra.mxu0 %v146
    %283 = vmatprep.subr.mxu0 %v149
    %284 = vmatpush1.xpose.msra.mxu0 %v148
    %285 = vmatprep.subr.mxu0 %v151
    %286 = vmatpush1.xpose.msra.mxu0 %v150
    %287 = vmatprep.subr.mxu0 %v153
    %288 = vmatpush1.xpose.msra.mxu0 %v152
    %289 = vmatprep.subr.mxu0 %v155
    %290 = vmatpush1.xpose.msra.mxu0 %v154
    %291 = vmatprep.subr.mxu0 %v157
    %292 = vmatpush1.xpose.msra.mxu0 %v156
    %293 = vmatprep.subr.mxu0 %v159
    %294 = vmatpush1.xpose.msra.mxu0 %v158
    %295 = vmatprep.subr.mxu0 %v161
    %296 = vmatpush1.xpose.msra.mxu0 %v160
    %297 = vmatprep.subr.mxu0 %v163
    %298 = vmatpush1.xpose.msra.mxu0 %v162
    %299 = vmatprep.subr.mxu0 %v165
    %300 = vmatpush1.xpose.msra.mxu0 %v164
    %301 = vmatprep.subr.mxu0 %v167
    %302 = vmatpush1.xpose.msra.mxu0 %v166
    %303 = vmatprep.subr.mxu0 %v169
    %304 = vmatpush1.xpose.msra.mxu0 %v168
    %305 = vmatprep.subr.mxu0 %v171
    %306 = vmatpush1.xpose.msra.mxu0 %v170
    %307 = vmatprep.subr.mxu0 %v173
    %308 = vmatpush1.xpose.msra.mxu0 %v172
    %309 = vmatprep.subr.mxu0 %v175
    %310 = vmatpush1.xpose.msra.mxu0 %v174
    %311 = vmatprep.subr.mxu0 %v177
    %312 = vmatpush1.xpose.msra.mxu0 %v176
    %313 = vmatprep.subr.mxu0 %v179
    %314 = vmatpush1.xpose.msra.mxu0 %v178
    %315 = vmatprep.mubr.f32.mxu0 %v51
    %316 = vmatmul.mubr.f32.gmra.mrb[0].mxu0 %v50
    %v317 = vpop.f32.mrb[0].mxu0
    %v318 = vadd.f32 0.0, %v317
    %v319 = vpop.f32.mrb[0].mxu0
    %v320 = vadd.f32 0.0, %v319
    %321 = vdwg.mxu0
    %v322 = vadd.f32 %v46, %v247
    %v323 = vadd.f32 %v47, %v249
    %v324 = vadd.f32 %v48, %v318
    %v325 = vadd.f32 %v49, %v320
    %326 = vst [vmem:[#allocation7] sm:$0xff] %v322
    %327 = vst [vmem:[#allocation7 + $0x8] sm:$0xff] %v323
    %328 = vst [vmem:[#allocation7 + $0x10] sm:$0xff] %v324
    %329 = vst [vmem:[#allocation7 + $0x18] sm:$0xff] %v325
    // Predicated region
    $region22: #{fast_linear.1} parent=1 // pred_check
      _
    $region23: #{fast_linear.1} parent=1 // pred_check_branch
      %331 = sbr.rel (0) target = $region25
    $region24: #{fast_linear.1} parent=1 // pred_region
      %s333 = ssub.s32 512, 512
      %334 = vsyncadd [#allocation4], %s333
      %s336 = sshll.u32 [#allocation7], 4
      %s337 = int_to_ptr.vmem [resolvable:$true] %s336
      %339 = dma.vmem_to_hbm [thread:$0]  %s337, 512, %s2, [#allocation4]
    $region25: #{fast_linear.1} parent=1 // pred_fallthru
      _
    // Predicated region
    $region26: #{fast_linear.1} parent=1 // pred_check
      _
    $region27: #{fast_linear.1} parent=1 // pred_check_branch
      %341 = sbr.rel (0) target = $region29
    $region28: #{fast_linear.1} parent=1 // pred_region
      %342 = dma.done [#allocation4], 512
    $region29: #{fast_linear.1} parent=1 // pred_fallthru
      _
    %343 = vsyncpa [#allocation3], 1
    %344 = vsyncpa [#allocation6], 1
    %345 = vsyncpa [#allocation4], 1

</llo_original>
